<compile_context>
chip_gen: v7x
topology: tpu7x:2x2x1
jax: 0.10.0
libtpu: 0.0.40
codegen_flags: <defaults>
</compile_context>

<pallas_src>
import functools

import jax
import jax.numpy as jnp
from jax.experimental import pallas as pl
from jax.experimental.pallas import tpu as pltpu


def _round_up(x: int, m: int) -> int:
    return ((x + m - 1) // m) * m


def _bf16_eup_supported() -> bool:
    """bf16 transcendental (EUP) path exists on v6e / v7x; keep f32 tanh on v5e and older."""
    try:
        kind = jax.devices()[0].device_kind.lower()
    except Exception:
        return False
    return not any(tag in kind for tag in ("v2", "v3", "v4", "v5"))


def ner_head_kernel(cls_ref, wp_ref, bp_ref, w1_ref, b1_ref, w2_ref, b2_ref, out_ref,
                    *, bf16_tanh: bool):
    # TODO(synk): the pretrained BERT encoder body (AutoModel) is not re-implemented;
    # the kernel starts from its last_hidden_state's [CLS] row and reproduces pooler + NER head.
    cls = cls_ref[...].astype(jnp.bfloat16)  # [tb, H]; f32 -> bf16 cast is a free VPU op

    # BERT pooler -> "pooler_output": tanh(cls @ Wp + bp); bf16 MXU operands, f32 accumulation.
    z = jnp.dot(cls, wp_ref[...], preferred_element_type=jnp.float32) + bp_ref[...]
    if bf16_tanh:
        pooled = jnp.tanh(z.astype(jnp.bfloat16))   # bf16 EUP (v6e/v7x): halves tanh work
    else:
        pooled = jnp.tanh(z).astype(jnp.bfloat16)   # f32 EUP (v5e has no bf16 EUP/VPU path)

    # dense_archi_ner: Linear + ReLU (Dropout is identity at inference)
    h = jnp.maximum(
        jnp.dot(pooled, w1_ref[...], preferred_element_type=jnp.float32) + b1_ref[...],
        0.0,
    )

    # output_archi_ner: Linear -> num_labels logits (lane-dense, padded to a multiple of 128)
    out_ref[...] = (
        jnp.dot(h.astype(jnp.bfloat16), w2_ref[...], preferred_element_type=jnp.float32)
        + b2_ref[...]
    )


def prepare_params(params):
    """One-time weight packing — call at model-load time, NOT per forward call.

    params = (wp, bp, w1, b1, w2, b2) with weights laid out [in_features, out_features]
    (transposed vs torch.nn.Linear.weight); biases may be 1-D (N,) torch-style or 2-D (1, N).
    Output feature dims are zero-padded to multiples of 128 (lane-dense) and weights cast to
    bf16 once, so the per-call path only moves the already-packed tensors.
    """
    wp, bp, w1, b1, w2, b2 = params
    H = wp.shape[0]
    Hd = w1.shape[1]
    L = w2.shape[1]
    assert wp.shape == (H, H), "pooler weight must be [H, H] (in, out)"
    assert w1.shape == (H, Hd), "dense weight must be [H, Hd] (in, out)"
    assert w2.shape == (Hd, L), "output weight must be [Hd, L] (in, out)"

    Hp, Hdp, Lp = _round_up(H, 128), _round_up(Hd, 128), _round_up(L, 128)

    def as_row(b, n):
        b = jnp.asarray(b, jnp.float32).reshape(1, -1)
        assert b.shape[1] == n, "bias length mismatch"
        return b

    def pad2(a, r, c):
        return jnp.pad(a, ((0, r - a.shape[0]), (0, c - a.shape[1])))

    return dict(
        wp=pad2(jnp.asarray(wp, jnp.float32), H, Hp).astype(jnp.bfloat16),
        bp=pad2(as_row(bp, H), 1, Hp),
        w1=pad2(jnp.asarray(w1, jnp.float32), Hp, Hdp).astype(jnp.bfloat16),
        b1=pad2(as_row(b1, Hd), 1, Hdp),
        w2=pad2(jnp.asarray(w2, jnp.float32), Hdp, Lp).astype(jnp.bfloat16),
        b2=pad2(as_row(b2, L), 1, Lp),
        dims=(H, Hd, L, Hp, Hdp, Lp),
    )


def ner_forward(x, packed, *, tb=None):
    """x: [B, S, H] float32 encoder last_hidden_state; packed = prepare_params(...).
    Returns logits [B, num_labels] (f32)."""
    B, S, H = x.shape
    Hm, Hd, L, Hp, Hdp, Lp = packed["dims"]
    assert H == Hm, "hidden size mismatch between inputs and packed params"

    # Batch tile: multiple of 16 (bf16 sublane packing), up to 256 rows (MXU M dim);
    # the grid only splits across TensorCores when B > 256.
    if tb is None:
        tb = min(256, _round_up(B, 16))
    tb = _round_up(tb, 16)
    grid = (pl.cdiv(B, tb),)

    if H % 128 == 0:
        # Zero-copy CLS feed: view x as [B, S*H]; the first H lanes of each row ARE the CLS
        # token, so the BlockSpec DMAs exactly (tb, H) straight from the [B, S, H] tensor.
        x_in = x.reshape(B, S * H)
    else:
        # Fallback (H not a multiple of 128): one strided gather of the CLS rows, no pad/cast.
        x_in = x[:, 0, :]
    in_spec_x = pl.BlockSpec((tb, H), lambda i: (i, 0))

    def full2(shape):
        # Grid-invariant blocks: Pallas keeps them resident in VMEM across grid steps.
        return pl.BlockSpec(shape, lambda i: (0, 0))

    weight_bytes = 2 * (H * Hp + Hp * Hdp + Hdp * Lp) + 4 * (Hp + Hdp + Lp)
    cost = pl.CostEstimate(
        flops=2 * B * (H * Hp + Hp * Hdp + Hdp * Lp),
        transcendentals=B * Hp,
        bytes_accessed=B * H * 4 + weight_bytes + B * Lp * 4,
    )

    kernel = functools.partial(ner_head_kernel, bf16_tanh=_bf16_eup_supported())

    out = pl.pallas_call(
        kernel,
        out_shape=jax.ShapeDtypeStruct((B, Lp), jnp.float32),
        grid_spec=pltpu.PrefetchScalarGridSpec(
            num_scalar_prefetch=0,
            grid=grid,
            in_specs=[
                in_spec_x,             # [CLS] rows, tiled over batch
                full2((H, Hp)),        # pooler weight (bf16)
                full2((1, Hp)),        # pooler bias   (f32)
                full2((Hp, Hdp)),      # dense weight  (bf16)
                full2((1, Hdp)),       # dense bias    (f32)
                full2((Hdp, Lp)),      # output weight (bf16, lane-dense padded)
                full2((1, Lp)),        # output bias   (f32)
            ],
            out_specs=pl.BlockSpec((tb, Lp), lambda i: (i, 0)),
        ),
        compiler_params=pltpu.CompilerParams(
            dimension_semantics=("parallel",),  # batch tiles shard across TCs on v7x
        ),
        cost_estimate=cost,
    )(x_in, packed["wp"], packed["bp"], packed["w1"], packed["b1"], packed["w2"], packed["b2"])

    return out[:, :L]


def make_params(key, H, Hd, L):
    ks = jax.random.split(key, 6)
    scale = 0.1
    wp = scale * jax.random.normal(ks[0], (H, H), jnp.float32)
    bp = scale * jax.random.normal(ks[1], (H,), jnp.float32)   # 1-D torch-style bias
    w1 = scale * jax.random.normal(ks[2], (H, Hd), jnp.float32)
    b1 = scale * jax.random.normal(ks[3], (Hd,), jnp.float32)
    w2 = scale * jax.random.normal(ks[4], (Hd, L), jnp.float32)
    b2 = scale * jax.random.normal(ks[5], (L,), jnp.float32)
    return (wp, bp, w1, b1, w2, b2)


def ner_forward_ref(x, params, *, mixed=True, bf16_tanh=False):
    """Pure-JAX reference. mixed=True mirrors the kernel's bf16-operand / f32-accum numerics."""
    wp, bp, w1, b1, w2, b2 = params
    bp = jnp.asarray(bp).reshape(1, -1)
    b1 = jnp.asarray(b1).reshape(1, -1)
    b2 = jnp.asarray(b2).reshape(1, -1)
    cls = x[:, 0, :]
    if not mixed:
        pooled = jnp.tanh(cls @ wp + bp)
        h = jnp.maximum(pooled @ w1 + b1, 0.0)
        return h @ w2 + b2
    dt = jnp.bfloat16
    z = jnp.dot(cls.astype(dt), wp.astype(dt), preferred_element_type=jnp.float32) + bp
    pooled = jnp.tanh(z.astype(dt)) if bf16_tanh else jnp.tanh(z).astype(dt)
    h = jnp.maximum(jnp.dot(pooled, w1.astype(dt), preferred_element_type=jnp.float32) + b1, 0.0)
    return jnp.dot(h.astype(dt), w2.astype(dt), preferred_element_type=jnp.float32) + b2


if __name__ == "__main__":
    # batch, seq, hidden, dense hidden, num_labels (H chosen as a multiple of 128 so the
    # zero-copy CLS BlockSpec path is exercised, as it would be for BERT-base/large).
    B, S, H, Hd, L = 8, 8, 128, 64, 9

    key = jax.random.PRNGKey(0)
    k_x, k_p = jax.random.split(key)
    x = jax.random.normal(k_x, (B, S, H), jnp.float32)  # encoder last_hidden_state
    params = make_params(k_p, H, Hd, L)

    packed = prepare_params(params)          # one-time packing ("model load" time)
    out = jax.block_until_ready(ner_forward(x, packed))

    bf16_tanh = _bf16_eup_supported()
    ref_mixed = ner_forward_ref(x, params, mixed=True, bf16_tanh=bf16_tanh)
    ref_f32 = ner_forward_ref(x, params, mixed=False)

    assert out.shape == (B, L)
    assert jnp.allclose(out, ref_mixed, atol=1e-2, rtol=1e-2), "mismatch vs mixed-precision ref"
    assert jnp.allclose(out, ref_f32, atol=5e-2, rtol=5e-2), "mismatch vs f32 ref"

    print("KERNEL_OK")
</pallas_src>

<mosaic_0001>
module attributes {stable_mosaic.version = 11 : i64} {
  func.func @ner_head_kernel(%arg0: i32, %arg1: memref<16x128xf32, #tpu.memory_space<vmem>>, %arg2: memref<128x128xbf16, #tpu.memory_space<vmem>>, %arg3: memref<1x128xf32, #tpu.memory_space<vmem>>, %arg4: memref<128x128xbf16, #tpu.memory_space<vmem>>, %arg5: memref<1x128xf32, #tpu.memory_space<vmem>>, %arg6: memref<128x128xbf16, #tpu.memory_space<vmem>>, %arg7: memref<1x128xf32, #tpu.memory_space<vmem>>, %arg8: memref<16x128xf32, #tpu.memory_space<vmem>>) attributes {dimension_semantics = [#tpu.dimension_semantics<parallel>], iteration_bounds = array<i64: 1>, scalar_prefetch = 0 : i64, scratch_operands = 0 : i64, tpu.core_type = #tpu.core_type<tc>, window_params = [{transform_indices = @transform_0, window_bounds = array<i64: 16, 128>}, {pipeline_mode = #tpu.pipeline_mode<synchronous>, transform_indices = @transform_1, window_bounds = array<i64: 128, 128>}, {pipeline_mode = #tpu.pipeline_mode<synchronous>, transform_indices = @transform_2, window_bounds = array<i64: 1, 128>}, {pipeline_mode = #tpu.pipeline_mode<synchronous>, transform_indices = @transform_3, window_bounds = array<i64: 128, 128>}, {pipeline_mode = #tpu.pipeline_mode<synchronous>, transform_indices = @transform_4, window_bounds = array<i64: 1, 128>}, {pipeline_mode = #tpu.pipeline_mode<synchronous>, transform_indices = @transform_5, window_bounds = array<i64: 128, 128>}, {pipeline_mode = #tpu.pipeline_mode<synchronous>, transform_indices = @transform_6, window_bounds = array<i64: 1, 128>}, {transform_indices = @transform_7, window_bounds = array<i64: 16, 128>}]} {
    %c0 = arith.constant 0 : index
    %c0_0 = arith.constant 0 : index
    %0 = vector.load %arg1[%c0, %c0_0] : memref<16x128xf32, #tpu.memory_space<vmem>>, vector<16x128xf32>
    %1 = arith.truncf %0 : vector<16x128xf32> to vector<16x128xbf16>
    %c0_1 = arith.constant 0 : index
    %c0_2 = arith.constant 0 : index
    %2 = vector.load %arg2[%c0_1, %c0_2] : memref<128x128xbf16, #tpu.memory_space<vmem>>, vector<128x128xbf16>
    %cst = arith.constant dense<0.000000e+00> : vector<16x128xf32>
    %3 = tpu.matmul %1, %2, %cst {dimension_numbers = #tpu.dot_dimension_numbers<[1], [0], [0], [1], [0, 0, 1, 1], [], []>} : vector<16x128xbf16>, vector<128x128xbf16>, vector<16x128xf32> -> vector<16x128xf32>
    %c0_3 = arith.constant 0 : index
    %c0_4 = arith.constant 0 : index
    %4 = vector.load %arg3[%c0_3, %c0_4] : memref<1x128xf32, #tpu.memory_space<vmem>>, vector<1x128xf32>
    %5 = vector.broadcast %4 : vector<1x128xf32> to vector<16x128xf32>
    %6 = arith.addf %3, %5 : vector<16x128xf32>
    %7 = arith.truncf %6 : vector<16x128xf32> to vector<16x128xbf16>
    %8 = math.tanh %7 : vector<16x128xbf16>
    %c0_5 = arith.constant 0 : index
    %c0_6 = arith.constant 0 : index
    %9 = vector.load %arg4[%c0_5, %c0_6] : memref<128x128xbf16, #tpu.memory_space<vmem>>, vector<128x128xbf16>
    %cst_7 = arith.constant dense<0.000000e+00> : vector<16x128xf32>
    %10 = tpu.matmul %8, %9, %cst_7 {dimension_numbers = #tpu.dot_dimension_numbers<[1], [0], [0], [1], [0, 0, 1, 1], [], []>} : vector<16x128xbf16>, vector<128x128xbf16>, vector<16x128xf32> -> vector<16x128xf32>
    %c0_8 = arith.constant 0 : index
    %c0_9 = arith.constant 0 : index
    %11 = vector.load %arg5[%c0_8, %c0_9] : memref<1x128xf32, #tpu.memory_space<vmem>>, vector<1x128xf32>
    %12 = vector.broadcast %11 : vector<1x128xf32> to vector<16x128xf32>
    %13 = arith.addf %10, %12 : vector<16x128xf32>
    %cst_10 = arith.constant 0.000000e+00 : f32
    %14 = vector.broadcast %cst_10 : f32 to vector<16x128xf32>
    %15 = arith.maximumf %13, %14 : vector<16x128xf32>
    %16 = arith.truncf %15 : vector<16x128xf32> to vector<16x128xbf16>
    %c0_11 = arith.constant 0 : index
    %c0_12 = arith.constant 0 : index
    %17 = vector.load %arg6[%c0_11, %c0_12] : memref<128x128xbf16, #tpu.memory_space<vmem>>, vector<128x128xbf16>
    %cst_13 = arith.constant dense<0.000000e+00> : vector<16x128xf32>
    %18 = tpu.matmul %16, %17, %cst_13 {dimension_numbers = #tpu.dot_dimension_numbers<[1], [0], [0], [1], [0, 0, 1, 1], [], []>} : vector<16x128xbf16>, vector<128x128xbf16>, vector<16x128xf32> -> vector<16x128xf32>
    %c0_14 = arith.constant 0 : index
    %c0_15 = arith.constant 0 : index
    %19 = vector.load %arg7[%c0_14, %c0_15] : memref<1x128xf32, #tpu.memory_space<vmem>>, vector<1x128xf32>
    %20 = vector.broadcast %19 : vector<1x128xf32> to vector<16x128xf32>
    %21 = arith.addf %18, %20 : vector<16x128xf32>
    %c0_16 = arith.constant 0 : index
    %c0_17 = arith.constant 0 : index
    %22 = vector.load %arg8[%c0_16, %c0_17] : memref<16x128xf32, #tpu.memory_space<vmem>>, vector<16x128xf32>
    tpu.vector_store %arg8[%c0_16, %c0_17], %21 {strides = array<i32>} : memref<16x128xf32, #tpu.memory_space<vmem>>, vector<16x128xf32>,
    return
  }
  func.func @transform_0(%arg0: i32) -> (i32, i32) {
    %c0_i32 = arith.constant 0 : i32
    %c0_i32_0 = arith.constant 0 : i32
    return %arg0, %c0_i32 : i32, i32
  }
  func.func @transform_1(%arg0: i32) -> (i32, i32) {
    %c0_i32 = arith.constant 0 : i32
    %c0_i32_0 = arith.constant 0 : i32
    %c0_i32_1 = arith.constant 0 : i32
    return %c0_i32, %c0_i32_0 : i32, i32
  }
  func.func @transform_2(%arg0: i32) -> (i32, i32) {
    %c0_i32 = arith.constant 0 : i32
    %c0_i32_0 = arith.constant 0 : i32
    %c0_i32_1 = arith.constant 0 : i32
    return %c0_i32, %c0_i32_0 : i32, i32
  }
  func.func @transform_3(%arg0: i32) -> (i32, i32) {
    %c0_i32 = arith.constant 0 : i32
    %c0_i32_0 = arith.constant 0 : i32
    %c0_i32_1 = arith.constant 0 : i32
    return %c0_i32, %c0_i32_0 : i32, i32
  }
  func.func @transform_4(%arg0: i32) -> (i32, i32) {
    %c0_i32 = arith.constant 0 : i32
    %c0_i32_0 = arith.constant 0 : i32
    %c0_i32_1 = arith.constant 0 : i32
    return %c0_i32, %c0_i32_0 : i32, i32
  }
  func.func @transform_5(%arg0: i32) -> (i32, i32) {
    %c0_i32 = arith.constant 0 : i32
    %c0_i32_0 = arith.constant 0 : i32
    %c0_i32_1 = arith.constant 0 : i32
    return %c0_i32, %c0_i32_0 : i32, i32
  }
  func.func @transform_6(%arg0: i32) -> (i32, i32) {
    %c0_i32 = arith.constant 0 : i32
    %c0_i32_0 = arith.constant 0 : i32
    %c0_i32_1 = arith.constant 0 : i32
    return %c0_i32, %c0_i32_0 : i32, i32
  }
  func.func @transform_7(%arg0: i32) -> (i32, i32) {
    %c0_i32 = arith.constant 0 : i32
    %c0_i32_0 = arith.constant 0 : i32
    return %arg0, %c0_i32 : i32, i32
  }
}

</mosaic_0001>

<llo_original>
// kernel: tpu_custom_call.1
$region0: #{tpu_custom_call.1}
  #allocation0 [shape = 'u32[]', space=smem, size = 0x4, offset = 0x4, fixed_abs, tag = 'smem constant byte address 0x4 - core index']
  #allocation1 [shape = 'u32[144,128]{1,0:T(1,128)}', space=vmem, size = 0x12000, scoped, tag = 'internal scratch']
  %s0 = inlined_call_operand.hbm [shape: f32[8,1024], index: 0, kind: input, shape index: {}]
  %s1 = inlined_call_operand.hbm [shape: bf16[128,128], index: 1, kind: input, shape index: {}]
  %s2 = inlined_call_operand.vmem [shape: f32[1,128], index: 2, kind: input, shape index: {}]
  %s3 = inlined_call_operand.hbm [shape: bf16[128,128], index: 3, kind: input, shape index: {}]
  %s4 = inlined_call_operand.vmem [shape: f32[1,128], index: 4, kind: input, shape index: {}]
  %s5 = inlined_call_operand.hbm [shape: bf16[128,128], index: 5, kind: input, shape index: {}]
  %s6 = inlined_call_operand.vmem [shape: f32[1,128], index: 6, kind: input, shape index: {}]
  %s7 = inlined_call_operand.hbm [shape: f32[8,128], index: 7, kind: output, shape index: {}]
  %s8 = sld [smem:[#allocation0]]
  $region54: #{tpu_custom_call.1} parent=0
    _
  %s10 = ssub.s32 1, %s8
  %s11 = scalar_select 0, %s10, %s8
  $region1: #{tpu_custom_call.1} parent=0
    #allocation2 [shape = 'u8[8192]{0}', space=vmem, size = 0x2000, scoped, tag = 'input window, operand 0, single buffered']
    #allocation3 [shape = 's32[1]{0}', space=sflag, size = 0x4, scoped, tag = 'scoped memory for tpu_custom_call.1']
    #allocation4 [shape = 's32[1]{0}', space=sflag, size = 0x4, scoped, tag = 'scoped memory for tpu_custom_call.1']
    #allocation5 [shape = 'u8[32768]{0}', space=vmem, size = 0x8000, scoped, tag = 'input window, operand 1, single buffered']
    #allocation6 [shape = 's32[1]{0}', space=sflag, size = 0x4, scoped, tag = 'scoped memory for tpu_custom_call.1']
    #allocation7 [shape = 'u8[32768]{0}', space=vmem, size = 0x8000, scoped, tag = 'input window, operand 3, single buffered']
    #allocation8 [shape = 'u8[32768]{0}', space=vmem, size = 0x8000, scoped, tag = 'input window, operand 5, single buffered']
    #allocation9 [shape = 's32[1]{0}', space=sflag, size = 0x4, scoped, tag = 'scoped memory for tpu_custom_call.1']
    #allocation10 [shape = 'u8[8192]{0}', space=vmem, size = 0x2000, scoped, tag = 'output window, operand 0, single buffered']
    %12 = vsyncpa [#allocation3], 0
    %13 = vsyncpa [#allocation6], 0
    %14 = vsyncpa [#allocation9], 0
    %15 = vsyncpa [#allocation4], 0
    // Predicated region
    $region2: #{tpu_custom_call.1} parent=1 // pred_check
      _
    $region3: #{tpu_custom_call.1} parent=1 // pred_check_branch
      %17 = sbr.rel (0) target = $region5
    $region4: #{tpu_custom_call.1} parent=1 // pred_region
      %s19 = ssub.s32 256, 128
      %20 = vsyncadd [#allocation3], %s19
      %s21 = sshll.u32 [#allocation2], 4
      %s22 = int_to_ptr.vmem [resolvable:$true] %s21
      %27 = dma.hbm_to_vmem [thread:$0]  %s0, 128, %s22, [#allocation3], 1024, 128, 8
    $region5: #{tpu_custom_call.1} parent=1 // pred_fallthru
      _
    // Predicated region
    $region6: #{tpu_custom_call.1} parent=1 // pred_check
      _
    $region7: #{tpu_custom_call.1} parent=1 // pred_check_branch
      %29 = sbr.rel (0) target = $region9
    $region8: #{tpu_custom_call.1} parent=1 // pred_region
      %s31 = ssub.s32 1024, 1024
      %32 = vsyncadd [#allocation6], %s31
      %s33 = sshll.u32 [#allocation5], 4
      %s34 = int_to_ptr.vmem [resolvable:$true] %s33
      %39 = dma.hbm_to_vmem [thread:$0]  %s1, 1024, %s34, [#allocation6], 64, 64, 4
    $region9: #{tpu_custom_call.1} parent=1 // pred_fallthru
      _
    // Predicated region
    $region10: #{tpu_custom_call.1} parent=1 // pred_check
      _
    $region11: #{tpu_custom_call.1} parent=1 // pred_check_branch
      %41 = sbr.rel (0) target = $region13
    $region12: #{tpu_custom_call.1} parent=1 // pred_region
      _
    $region13: #{tpu_custom_call.1} parent=1 // pred_fallthru
      _
    // Predicated region
    $region14: #{tpu_custom_call.1} parent=1 // pred_check
      _
    $region15: #{tpu_custom_call.1} parent=1 // pred_check_branch
      %43 = sbr.rel (0) target = $region17
    $region16: #{tpu_custom_call.1} parent=1 // pred_region
      %s45 = ssub.s32 1024, 1024
      %46 = vsyncadd [#allocation6], %s45
      %s47 = sshll.u32 [#allocation7], 4
      %s48 = int_to_ptr.vmem [resolvable:$true] %s47
      %53 = dma.hbm_to_vmem [thread:$0]  %s3, 1024, %s48, [#allocation6], 64, 64, 4
    $region17: #{tpu_custom_call.1} parent=1 // pred_fallthru
      _
    // Predicated region
    $region18: #{tpu_custom_call.1} parent=1 // pred_check
      _
    $region19: #{tpu_custom_call.1} parent=1 // pred_check_branch
      %55 = sbr.rel (0) target = $region21
    $region20: #{tpu_custom_call.1} parent=1 // pred_region
      _
    $region21: #{tpu_custom_call.1} parent=1 // pred_fallthru
      _
    // Predicated region
    $region22: #{tpu_custom_call.1} parent=1 // pred_check
      _
    $region23: #{tpu_custom_call.1} parent=1 // pred_check_branch
      %57 = sbr.rel (0) target = $region25
    $region24: #{tpu_custom_call.1} parent=1 // pred_region
      %s59 = ssub.s32 1024, 1024
      %60 = vsyncadd [#allocation9], %s59
      %s61 = sshll.u32 [#allocation8], 4
      %s62 = int_to_ptr.vmem [resolvable:$true] %s61
      %67 = dma.hbm_to_vmem [thread:$0]  %s5, 1024, %s62, [#allocation9], 64, 64, 4
    $region25: #{tpu_custom_call.1} parent=1 // pred_fallthru
      _
    // Predicated region
    $region26: #{tpu_custom_call.1} parent=1 // pred_check
      _
    $region27: #{tpu_custom_call.1} parent=1 // pred_check_branch
      %69 = sbr.rel (0) target = $region29
    $region28: #{tpu_custom_call.1} parent=1 // pred_region
      _
    $region29: #{tpu_custom_call.1} parent=1 // pred_fallthru
      _
    // Predicated region
    $region30: #{tpu_custom_call.1} parent=1 // pred_check
      _
    $region31: #{tpu_custom_call.1} parent=1 // pred_check_branch
      %71 = sbr.rel (0) target = $region33
    $region32: #{tpu_custom_call.1} parent=1 // pred_region
      %72 = dma.done [#allocation3], 256
    $region33: #{tpu_custom_call.1} parent=1 // pred_fallthru
      _
    // Predicated region
    $region34: #{tpu_custom_call.1} parent=1 // pred_check
      _
    $region35: #{tpu_custom_call.1} parent=1 // pred_check_branch
      %74 = sbr.rel (0) target = $region37
    $region36: #{tpu_custom_call.1} parent=1 // pred_region
      %75 = dma.done [#allocation6], 1024
    $region37: #{tpu_custom_call.1} parent=1 // pred_fallthru
      _
    // Predicated region
    $region38: #{tpu_custom_call.1} parent=1 // pred_check
      _
    $region39: #{tpu_custom_call.1} parent=1 // pred_check_branch
      %77 = sbr.rel (0) target = $region41
    $region40: #{tpu_custom_call.1} parent=1 // pred_region
      %78 = dma.done [#allocation6], 1024
    $region41: #{tpu_custom_call.1} parent=1 // pred_fallthru
      _
    // Predicated region
    $region42: #{tpu_custom_call.1} parent=1 // pred_check
      _
    $region43: #{tpu_custom_call.1} parent=1 // pred_check_branch
      %80 = sbr.rel (0) target = $region45
    $region44: #{tpu_custom_call.1} parent=1 // pred_region
      %81 = dma.done [#allocation9], 1024
    $region45: #{tpu_custom_call.1} parent=1 // pred_fallthru
      _
    %v83 = vld [vmem:[#allocation2] sm:$0xff]
    %v84 = vld [vmem:[#allocation2 + $0x8] sm:$0xff]
    %v85 = vpack.c.bf16 %v84, %v83
    %v86 = vld [vmem:[#allocation5] sm:$0xf]
    %v87 = vld [vmem:[#allocation5 + $0x4] sm:$0xf]
    %v88 = vld [vmem:[#allocation5 + $0x8] sm:$0xf]
    %v89 = vld [vmem:[#allocation5 + $0xc] sm:$0xf]
    %v90 = vld [vmem:[#allocation5 + $0x10] sm:$0xf]
    %v91 = vld [vmem:[#allocation5 + $0x14] sm:$0xf]
    %v92 = vld [vmem:[#allocation5 + $0x18] sm:$0xf]
    %v93 = vld [vmem:[#allocation5 + $0x1c] sm:$0xf]
    %v94 = vld [vmem:[#allocation5 + $0x20] sm:$0xf]
    %v95 = vld [vmem:[#allocation5 + $0x24] sm:$0xf]
    %v96 = vld [vmem:[#allocation5 + $0x28] sm:$0xf]
    %v97 = vld [vmem:[#allocation5 + $0x2c] sm:$0xf]
    %v98 = vld [vmem:[#allocation5 + $0x30] sm:$0xf]
    %v99 = vld [vmem:[#allocation5 + $0x34] sm:$0xf]
    %v100 = vld [vmem:[#allocation5 + $0x38] sm:$0xf]
    %v101 = vld [vmem:[#allocation5 + $0x3c] sm:$0xf]
    %v102 = vld [vmem:[%s2] sm:$0x1]
    %v104 = vlaneseq
    %v105 = vshrl.u32 %v104, 7
    %v106 = vsub.s32 0, %v105
    %v107 = vrot.slane %v102, %v106
    %v125 = vunpack.c.l.b16 %v86
    %v126 = vunpack.c.l.b16 %v87
    %v127 = vunpack.c.l.b16 %v88
    %v128 = vunpack.c.l.b16 %v89
    %v129 = vunpack.c.l.b16 %v90
    %v130 = vunpack.c.l.b16 %v91
    %v131 = vunpack.c.l.b16 %v92
    %v132 = vunpack.c.l.b16 %v93
    %v133 = vunpack.c.l.b16 %v94
    %v134 = vunpack.c.l.b16 %v95
    %v135 = vunpack.c.l.b16 %v96
    %v136 = vunpack.c.l.b16 %v97
    %v137 = vunpack.c.l.b16 %v98
    %v138 = vunpack.c.l.b16 %v99
    %v139 = vunpack.c.l.b16 %v100
    %v140 = vunpack.c.l.b16 %v101
    %v141 = vpack.c.b16 %v126, %v125
    %v142 = vpack.c.b16 %v128, %v127
    %v143 = vpack.c.b16 %v130, %v129
    %v144 = vpack.c.b16 %v132, %v131
    %v145 = vpack.c.b16 %v134, %v133
    %v146 = vpack.c.b16 %v136, %v135
    %v147 = vpack.c.b16 %v138, %v137
    %v148 = vpack.c.b16 %v140, %v139
    %157 = vmatprep.subr.bf16.mxu0 0
    %158 = vmatpush1.bf16.msra.mxu0 %v141
    %159 = vmatprep.subr.bf16.mxu0 0
    %160 = vmatpush1.bf16.msra.mxu0 %v142
    %161 = vmatprep.subr.bf16.mxu0 0
    %162 = vmatpush1.bf16.msra.mxu0 %v143
    %163 = vmatprep.subr.bf16.mxu0 0
    %164 = vmatpush1.bf16.msra.mxu0 %v144
    %165 = vmatprep.subr.bf16.mxu0 0
    %166 = vmatpush1.bf16.msra.mxu0 %v145
    %167 = vmatprep.subr.bf16.mxu0 0
    %168 = vmatpush1.bf16.msra.mxu0 %v146
    %169 = vmatprep.subr.bf16.mxu0 0
    %170 = vmatpush1.bf16.msra.mxu0 %v147
    %171 = vmatprep.subr.bf16.mxu0 0
    %172 = vmatpush1.bf16.msra.mxu0 %v148
    %173 = vmatprep.subr.bf16.mxu0 0
    %174 = vmatpush1.bf16.msra.mxu0 0
    %175 = vmatprep.subr.bf16.mxu0 0
    %176 = vmatpush1.bf16.msra.mxu0 0
    %177 = vmatprep.subr.bf16.mxu0 0
    %178 = vmatpush1.bf16.msra.mxu0 0
    %179 = vmatprep.subr.bf16.mxu0 0
    %180 = vmatpush1.bf16.msra.mxu0 0
    %181 = vmatprep.subr.bf16.mxu0 0
    %182 = vmatpush1.bf16.msra.mxu0 0
    %183 = vmatprep.subr.bf16.mxu0 0
    %184 = vmatpush1.bf16.msra.mxu0 0
    %185 = vmatprep.subr.bf16.mxu0 0
    %186 = vmatpush1.bf16.msra.mxu0 0
    %187 = vmatprep.subr.bf16.mxu0 0
    %188 = vmatpush1.bf16.msra.mxu0 0
    %189 = vmatprep.mubr.bf16.mxu0 0
    %190 = vmatmul.mubr.bf16.gmra.mrb[0].mxu0 %v85
    %v191 = vpop.f32.mrb[0].mxu0
    %v192 = vadd.f32 %v107, %v191
    %v193 = vpop.f32.mrb[0].mxu0
    %v194 = vpop.f32.mrb[0].mxu0
    %v195 = vadd.f32 %v107, %v194
    %v196 = vpop.f32.mrb[0].mxu0
    %197 = vdwg.mxu0
    %v198 = vpack.c.bf16 %v195, %v192
    %v199 = vtanh.bf16.pop %v198
    %v200 = vld [vmem:[#allocation7] sm:$0xf]
    %v201 = vld [vmem:[#allocation7 + $0x4] sm:$0xf]
    %v202 = vld [vmem:[#allocation7 + $0x8] sm:$0xf]
    %v203 = vld [vmem:[#allocation7 + $0xc] sm:$0xf]
    %v204 = vld [vmem:[#allocation7 + $0x10] sm:$0xf]
    %v205 = vld [vmem:[#allocation7 + $0x14] sm:$0xf]
    %v206 = vld [vmem:[#allocation7 + $0x18] sm:$0xf]
    %v207 = vld [vmem:[#allocation7 + $0x1c] sm:$0xf]
    %v208 = vld [vmem:[#allocation7 + $0x20] sm:$0xf]
    %v209 = vld [vmem:[#allocation7 + $0x24] sm:$0xf]
    %v210 = vld [vmem:[#allocation7 + $0x28] sm:$0xf]
    %v211 = vld [vmem:[#allocation7 + $0x2c] sm:$0xf]
    %v212 = vld [vmem:[#allocation7 + $0x30] sm:$0xf]
    %v213 = vld [vmem:[#allocation7 + $0x34] sm:$0xf]
    %v214 = vld [vmem:[#allocation7 + $0x38] sm:$0xf]
    %v215 = vld [vmem:[#allocation7 + $0x3c] sm:$0xf]
    %v216 = vld [vmem:[%s4] sm:$0x1]
    %v218 = vlaneseq
    %v219 = vshrl.u32 %v218, 7
    %v220 = vsub.s32 0, %v219
    %v221 = vrot.slane %v216, %v220
    %v239 = vunpack.c.l.b16 %v200
    %v240 = vunpack.c.l.b16 %v201
    %v241 = vunpack.c.l.b16 %v202
    %v242 = vunpack.c.l.b16 %v203
    %v243 = vunpack.c.l.b16 %v204
    %v244 = vunpack.c.l.b16 %v205
    %v245 = vunpack.c.l.b16 %v206
    %v246 = vunpack.c.l.b16 %v207
    %v247 = vunpack.c.l.b16 %v208
    %v248 = vunpack.c.l.b16 %v209
    %v249 = vunpack.c.l.b16 %v210
    %v250 = vunpack.c.l.b16 %v211
    %v251 = vunpack.c.l.b16 %v212
    %v252 = vunpack.c.l.b16 %v213
    %v253 = vunpack.c.l.b16 %v214
    %v254 = vunpack.c.l.b16 %v215
    %v255 = vpack.c.b16 %v240, %v239
    %v256 = vpack.c.b16 %v242, %v241
    %v257 = vpack.c.b16 %v244, %v243
    %v258 = vpack.c.b16 %v246, %v245
    %v259 = vpack.c.b16 %v248, %v247
    %v260 = vpack.c.b16 %v250, %v249
    %v261 = vpack.c.b16 %v252, %v251
    %v262 = vpack.c.b16 %v254, %v253
    %271 = vmatprep.subr.bf16.mxu0 0
    %272 = vmatpush1.bf16.msra.mxu0 %v255
    %273 = vmatprep.subr.bf16.mxu0 0
    %274 = vmatpush1.bf16.msra.mxu0 %v256
    %275 = vmatprep.subr.bf16.mxu0 0
    %276 = vmatpush1.bf16.msra.mxu0 %v257
    %277 = vmatprep.subr.bf16.mxu0 0
    %278 = vmatpush1.bf16.msra.mxu0 %v258
    %279 = vmatprep.subr.bf16.mxu0 0
    %280 = vmatpush1.bf16.msra.mxu0 %v259
    %281 = vmatprep.subr.bf16.mxu0 0
    %282 = vmatpush1.bf16.msra.mxu0 %v260
    %283 = vmatprep.subr.bf16.mxu0 0
    %284 = vmatpush1.bf16.msra.mxu0 %v261
    %285 = vmatprep.subr.bf16.mxu0 0
    %286 = vmatpush1.bf16.msra.mxu0 %v262
    %287 = vmatprep.subr.bf16.mxu0 0
    %288 = vmatpush1.bf16.msra.mxu0 0
    %289 = vmatprep.subr.bf16.mxu0 0
    %290 = vmatpush1.bf16.msra.mxu0 0
    %291 = vmatprep.subr.bf16.mxu0 0
    %292 = vmatpush1.bf16.msra.mxu0 0
    %293 = vmatprep.subr.bf16.mxu0 0
    %294 = vmatpush1.bf16.msra.mxu0 0
    %295 = vmatprep.subr.bf16.mxu0 0
    %296 = vmatpush1.bf16.msra.mxu0 0
    %297 = vmatprep.subr.bf16.mxu0 0
    %298 = vmatpush1.bf16.msra.mxu0 0
    %299 = vmatprep.subr.bf16.mxu0 0
    %300 = vmatpush1.bf16.msra.mxu0 0
    %301 = vmatprep.subr.bf16.mxu0 0
    %302 = vmatpush1.bf16.msra.mxu0 0
    %303 = vmatprep.mubr.bf16.mxu0 0
    %304 = vmatmul.mubr.bf16.gmra.mrb[0].mxu0 %v199
    %v305 = vpop.f32.mrb[0].mxu0
    %v306 = vadd.f32 %v221, %v305
    %v307 = vpop.f32.mrb[0].mxu0
    %v308 = vpop.f32.mrb[0].mxu0
    %v309 = vadd.f32 %v221, %v308
    %v310 = vpop.f32.mrb[0].mxu0
    %311 = vdwg.mxu0
    %v312 = vmax.f32 %v306, 0.0
    %v313 = vmax.f32 %v309, 0.0
    %v314 = vpack.c.bf16 %v313, %v312
    %v315 = vld [vmem:[#allocation8] sm:$0xf]
    %v316 = vld [vmem:[#allocation8 + $0x4] sm:$0xf]
    %v317 = vld [vmem:[#allocation8 + $0x8] sm:$0xf]
    %v318 = vld [vmem:[#allocation8 + $0xc] sm:$0xf]
    %v319 = vld [vmem:[#allocation8 + $0x10] sm:$0xf]
    %v320 = vld [vmem:[#allocation8 + $0x14] sm:$0xf]
    %v321 = vld [vmem:[#allocation8 + $0x18] sm:$0xf]
    %v322 = vld [vmem:[#allocation8 + $0x1c] sm:$0xf]
    %v323 = vld [vmem:[#allocation8 + $0x20] sm:$0xf]
    %v324 = vld [vmem:[#allocation8 + $0x24] sm:$0xf]
    %v325 = vld [vmem:[#allocation8 + $0x28] sm:$0xf]
    %v326 = vld [vmem:[#allocation8 + $0x2c] sm:$0xf]
    %v327 = vld [vmem:[#allocation8 + $0x30] sm:$0xf]
    %v328 = vld [vmem:[#allocation8 + $0x34] sm:$0xf]
    %v329 = vld [vmem:[#allocation8 + $0x38] sm:$0xf]
    %v330 = vld [vmem:[#allocation8 + $0x3c] sm:$0xf]
    %v331 = vld [vmem:[%s6] sm:$0x1]
    %v333 = vlaneseq
    %v334 = vshrl.u32 %v333, 7
    %v335 = vsub.s32 0, %v334
    %v336 = vrot.slane %v331, %v335
    %v354 = vunpack.c.l.b16 %v315
    %v355 = vunpack.c.l.b16 %v316
    %v356 = vunpack.c.l.b16 %v317
    %v357 = vunpack.c.l.b16 %v318
    %v358 = vunpack.c.l.b16 %v319
    %v359 = vunpack.c.l.b16 %v320
    %v360 = vunpack.c.l.b16 %v321
    %v361 = vunpack.c.l.b16 %v322
    %v362 = vunpack.c.l.b16 %v323
    %v363 = vunpack.c.l.b16 %v324
    %v364 = vunpack.c.l.b16 %v325
    %v365 = vunpack.c.l.b16 %v326
    %v366 = vunpack.c.l.b16 %v327
    %v367 = vunpack.c.l.b16 %v328
    %v368 = vunpack.c.l.b16 %v329
    %v369 = vunpack.c.l.b16 %v330
    %v370 = vpack.c.b16 %v355, %v354
    %v371 = vpack.c.b16 %v357, %v356
    %v372 = vpack.c.b16 %v359, %v358
    %v373 = vpack.c.b16 %v361, %v360
    %v374 = vpack.c.b16 %v363, %v362
    %v375 = vpack.c.b16 %v365, %v364
    %v376 = vpack.c.b16 %v367, %v366
    %v377 = vpack.c.b16 %v369, %v368
    %386 = vmatprep.subr.bf16.mxu0 0
    %387 = vmatpush1.bf16.msra.mxu0 %v370
    %388 = vmatprep.subr.bf16.mxu0 0
    %389 = vmatpush1.bf16.msra.mxu0 %v371
    %390 = vmatprep.subr.bf16.mxu0 0
    %391 = vmatpush1.bf16.msra.mxu0 %v372
    %392 = vmatprep.subr.bf16.mxu0 0
    %393 = vmatpush1.bf16.msra.mxu0 %v373
    %394 = vmatprep.subr.bf16.mxu0 0
    %395 = vmatpush1.bf16.msra.mxu0 %v374
    %396 = vmatprep.subr.bf16.mxu0 0
    %397 = vmatpush1.bf16.msra.mxu0 %v375
    %398 = vmatprep.subr.bf16.mxu0 0
    %399 = vmatpush1.bf16.msra.mxu0 %v376
    %400 = vmatprep.subr.bf16.mxu0 0
    %401 = vmatpush1.bf16.msra.mxu0 %v377
    %402 = vmatprep.subr.bf16.mxu0 0
    %403 = vmatpush1.bf16.msra.mxu0 0
    %404 = vmatprep.subr.bf16.mxu0 0
    %405 = vmatpush1.bf16.msra.mxu0 0
    %406 = vmatprep.subr.bf16.mxu0 0
    %407 = vmatpush1.bf16.msra.mxu0 0
    %408 = vmatprep.subr.bf16.mxu0 0
    %409 = vmatpush1.bf16.msra.mxu0 0
    %410 = vmatprep.subr.bf16.mxu0 0
    %411 = vmatpush1.bf16.msra.mxu0 0
    %412 = vmatprep.subr.bf16.mxu0 0
    %413 = vmatpush1.bf16.msra.mxu0 0
    %414 = vmatprep.subr.bf16.mxu0 0
    %415 = vmatpush1.bf16.msra.mxu0 0
    %416 = vmatprep.subr.bf16.mxu0 0
    %417 = vmatpush1.bf16.msra.mxu0 0
    %418 = vmatprep.mubr.bf16.mxu0 0
    %419 = vmatmul.mubr.bf16.gmra.mrb[0].mxu0 %v314
    %v420 = vpop.f32.mrb[0].mxu0
    %v421 = vadd.f32 %v336, %v420
    %v422 = vpop.f32.mrb[0].mxu0
    %v423 = vpop.f32.mrb[0].mxu0
    %v424 = vadd.f32 %v336, %v423
    %v425 = vpop.f32.mrb[0].mxu0
    %426 = vdwg.mxu0
    %427 = vst [vmem:[#allocation10] sm:$0xff] %v421
    %428 = vst [vmem:[#allocation10 + $0x8] sm:$0xff] %v424
    // Predicated region
    $region46: #{tpu_custom_call.1} parent=1 // pred_check
      _
    $region47: #{tpu_custom_call.1} parent=1 // pred_check_branch
      %430 = sbr.rel (0) target = $region49
    $region48: #{tpu_custom_call.1} parent=1 // pred_region
      %s432 = ssub.s32 256, 128
      %433 = vsyncadd [#allocation4], %s432
      %s434 = sshll.u32 [#allocation10], 4
      %s435 = int_to_ptr.vmem [resolvable:$true] %s434
      %440 = dma.vmem_to_hbm [thread:$0]  %s435, 128, %s7, [#allocation4], 128, 128, 8
    $region49: #{tpu_custom_call.1} parent=1 // pred_fallthru
      _
    // Predicated region
    $region50: #{tpu_custom_call.1} parent=1 // pred_check
      _
    $region51: #{tpu_custom_call.1} parent=1 // pred_check_branch
      %442 = sbr.rel (0) target = $region53
    $region52: #{tpu_custom_call.1} parent=1 // pred_region
      %443 = dma.done [#allocation4], 256
    $region53: #{tpu_custom_call.1} parent=1 // pred_fallthru
      _
    %444 = vsyncpa [#allocation3], 1
    %445 = vsyncpa [#allocation6], 1
    %446 = vsyncpa [#allocation9], 1
    %447 = vsyncpa [#allocation4], 1

</llo_original>
